<compile_context>
chip_gen: v7x
topology: tpu7x:2x2x1
jax: 0.10.0
libtpu: 0.0.40
codegen_flags: <defaults>
</compile_context>

<pallas_src>
import jax
import jax.numpy as jnp
from jax.experimental import pallas as pl
from jax.experimental.pallas import tpu as pltpu


def _graphconv_kernel(a_ref, x_ref, w_ref, b_ref, o_ref):
    """One row tile of nodes.

    a_ref: [S, TN, N]     normalized supports (A_s + I), compute dtype
    x_ref: [N, B*D]       batch-folded inputs, compute dtype (VMEM-resident)
    w_ref: [S, B*D, B*O]  per-support block-diagonal linear weight (resident)
    b_ref: [1, B*O]       bias tiled over batch, float32 (resident)
    o_ref: [TN, B*O]      batch-folded output tile (written once)
    """
    n_supports = a_ref.shape[0]          # static -> loop fully unrolled
    x = x_ref[...]
    acc = jnp.broadcast_to(b_ref[...], o_ref.shape).astype(jnp.float32)
    for s in range(n_supports):
        # Graph propagation on the MXU: (A_s + I) @ X0 -> [TN, B*D], f32 acc.
        prop = jnp.dot(a_ref[s], x, preferred_element_type=jnp.float32)
        # Per-support linear: [TN, B*D] @ [B*D, B*O] -> [TN, B*O].
        # prop is cast (intentionally) to the MXU operand dtype; the
        # accumulation itself stays in f32 via preferred_element_type.
        acc = acc + jnp.dot(prop.astype(w_ref.dtype), w_ref[s],
                            preferred_element_type=jnp.float32)
    o_ref[...] = acc.astype(o_ref.dtype)


def _pick_row_tile(n):
    """Row tile of the adjacency; keeps per-step blocks modest for v7x's 64 MiB
    VMEM while staying 256-aligned for the v6e/v7x MXU when possible."""
    if n <= 512:
        return n
    for t in (512, 256, 128, 64, 32, 16, 8):
        if n % t == 0:
            return t
    return n  # TODO(synk): pad N to a multiple of 8 for ragged node counts


def graph_conv_mx(inputs, supports, weight, bias, *, compute_dtype=jnp.bfloat16):
    """
    inputs:   [B, N, D]  float32
    supports: [S, N, N]  float32 (dense)
    weight:   [D*S, O]   float32; concatenated-feature ordering matches the
                         torch reshape (column index of the concat is d*S + s)
    bias:     [O]        float32
    returns:  [B, N, O]  float32
    """
    B, N, D = inputs.shape
    S = supports.shape[0]
    O = weight.shape[1]
    BD, BO = B * D, B * O
    cd = jnp.dtype(compute_dtype)

    # ---- one-time layout / parameter prep (plain JAX, outside the hot loop) ----
    # Matrix_Normalization folded in once: A_s + I.
    a_norm = (supports + jnp.eye(N, dtype=supports.dtype)).astype(cd)      # [S, N, N]
    # Fold batch into lanes: x0[n, b*D + d] = inputs[b, n, d].
    x0 = jnp.transpose(inputs, (1, 0, 2)).reshape(N, BD).astype(cd)        # [N, B*D]
    # Torch feature ordering (d*S + s) -> per-support weight [S, D, O].
    w_k = weight.reshape(D, S, O).transpose(1, 0, 2)
    # Block-diagonal over batch so the 2nd matmul emits a lane-dense [*, B*O]:
    #   w_bd[s, b*D + d, c*O + o] = (b == c) * w_k[s, d, o]
    w_bd = (jnp.einsum('bc,sdo->sbdco', jnp.eye(B, dtype=weight.dtype), w_k)
            .reshape(S, BD, BO).astype(cd))                                # [S, B*D, B*O]
    # Bias tiled over batch: bias_bo[0, b*O + o] = bias[o]; kept in f32.
    bias_bo = jnp.tile(bias, B).reshape(1, BO).astype(jnp.float32)

    tn = _pick_row_tile(N)
    grid = (N // tn,)

    cost = pl.CostEstimate(
        flops=2 * S * N * (N * BD + BD * BO),
        transcendentals=0,
        bytes_accessed=(S * N * N + N * BD + S * BD * BO) * cd.itemsize
        + (BO + N * BO) * 4,
    )

    out_folded = pl.pallas_call(
        _graphconv_kernel,
        out_shape=jax.ShapeDtypeStruct((N, BO), inputs.dtype),
        grid_spec=pltpu.PrefetchScalarGridSpec(
            num_scalar_prefetch=0,
            grid=grid,
            in_specs=[
                # row tile of all S normalized supports (each read once total)
                pl.BlockSpec((S, tn, N), lambda i: (0, i, 0)),
                # batch-folded inputs: VMEM-resident (constant block index)
                pl.BlockSpec((N, BD), lambda i: (0, 0)),
                # per-support block-diagonal weights: VMEM-resident
                pl.BlockSpec((S, BD, BO), lambda i: (0, 0, 0)),
                # bias: VMEM-resident
                pl.BlockSpec((1, BO), lambda i: (0, 0)),
            ],
            out_specs=pl.BlockSpec((tn, BO), lambda i: (i, 0)),
        ),
        compiler_params=pltpu.CompilerParams(
            # single parallel axis over node-row tiles -> megacore-friendly
            # even for B == 1; default scoped-VMEM limit is ample at these
            # tile sizes (tn <= 512).
            dimension_semantics=("parallel",)),
        cost_estimate=cost,
    )(a_norm, x0, w_bd, bias_bo)

    # Unfold the batch back out of the lanes: [N, B*O] -> [B, N, O].
    return out_folded.reshape(N, B, O).transpose(1, 0, 2)


def _reference(inputs, supports, weight, bias):
    # Pure-JAX reproduction of the PyTorch forward (for verification).
    B, N, D = inputs.shape
    S = supports.shape[0]
    eye = jnp.eye(N, dtype=supports.dtype)
    # feat[b, n, d, s] = ((A_s + I) @ inputs[b])[n, d]
    feat = jnp.einsum('snm,bmd->bnds', supports + eye, inputs)
    feat = feat.reshape(B, N, D * S)          # column order d*S + s
    return feat @ weight + bias


if __name__ == "__main__":
    # Small shapes consistent with the module's forward:
    B, N, D = 2, 16, 4          # batch, num_nodes, input_dim
    S, O = 2, 32                # n_supports, output_dim

    key = jax.random.PRNGKey(0)
    k_x, k_a, k_w, k_b = jax.random.split(key, 4)

    inputs = jax.random.normal(k_x, (B, N, D), dtype=jnp.float32)
    supports = jax.random.normal(k_a, (S, N, N), dtype=jnp.float32)

    # Deterministic nn.Linear(D*S, O)-shaped parameters (synthetic init).
    fan_in = D * S
    bound = 1.0 / (fan_in ** 0.5)
    weight = jax.random.uniform(k_w, (fan_in, O), minval=-bound, maxval=bound,
                                dtype=jnp.float32)
    bias = jax.random.uniform(k_b, (O,), minval=-bound, maxval=bound,
                              dtype=jnp.float32)

    ref = _reference(inputs, supports, weight, bias)

    # f32 MXU path: bit-for-bit-grade check against the reference.
    out_f32 = jax.block_until_ready(
        graph_conv_mx(inputs, supports, weight, bias,
                      compute_dtype=jnp.float32))
    assert out_f32.shape == (B, N, O)
    assert jnp.allclose(out_f32, ref, atol=1e-4, rtol=1e-4), "f32 mismatch"

    # bf16-operand / f32-accumulation path (the fast MXU path): loose check.
    out_bf16 = jax.block_until_ready(
        graph_conv_mx(inputs, supports, weight, bias,
                      compute_dtype=jnp.bfloat16))
    assert out_bf16.shape == (B, N, O)
    assert jnp.allclose(out_bf16, ref, atol=2e-1, rtol=5e-2), "bf16 mismatch"

    print("KERNEL_OK")
</pallas_src>

<mosaic_0001>
module attributes {stable_mosaic.version = 11 : i64} {
  func.func @_graphconv_kernel(%arg0: i32, %arg1: memref<2x16x16xf32, #tpu.memory_space<vmem>>, %arg2: memref<16x8xf32, #tpu.memory_space<vmem>>, %arg3: memref<2x8x64xf32, #tpu.memory_space<vmem>>, %arg4: memref<1x64xf32, #tpu.memory_space<vmem>>, %arg5: memref<16x64xf32, #tpu.memory_space<vmem>>) attributes {dimension_semantics = [#tpu.dimension_semantics<parallel>], iteration_bounds = array<i64: 1>, scalar_prefetch = 0 : i64, scratch_operands = 0 : i64, tpu.core_type = #tpu.core_type<tc>, window_params = [{transform_indices = @transform_0, window_bounds = array<i64: 2, 16, 16>}, {pipeline_mode = #tpu.pipeline_mode<synchronous>, transform_indices = @transform_1, window_bounds = array<i64: 16, 8>}, {pipeline_mode = #tpu.pipeline_mode<synchronous>, transform_indices = @transform_2, window_bounds = array<i64: 2, 8, 64>}, {pipeline_mode = #tpu.pipeline_mode<synchronous>, transform_indices = @transform_3, window_bounds = array<i64: 1, 64>}, {transform_indices = @transform_4, window_bounds = array<i64: 16, 64>}]} {
    %c0 = arith.constant 0 : index
    %c0_0 = arith.constant 0 : index
    %0 = vector.load %arg2[%c0, %c0_0] : memref<16x8xf32, #tpu.memory_space<vmem>>, vector<16x8xf32>
    %c0_1 = arith.constant 0 : index
    %c0_2 = arith.constant 0 : index
    %1 = vector.load %arg4[%c0_1, %c0_2] : memref<1x64xf32, #tpu.memory_space<vmem>>, vector<1x64xf32>
    %2 = vector.shape_cast %1 : vector<1x64xf32> to vector<1x64xf32>
    %3 = vector.broadcast %2 : vector<1x64xf32> to vector<16x64xf32>
    %c0_3 = arith.constant 0 : index
    %c0_4 = arith.constant 0 : index
    %c0_5 = arith.constant 0 : index
    %4 = vector.load %arg1[%c0_3, %c0_4, %c0_5] : memref<2x16x16xf32, #tpu.memory_space<vmem>>, vector<1x16x16xf32>
    %5 = vector.shape_cast %4 : vector<1x16x16xf32> to vector<16x16xf32>
    %cst = arith.constant dense<0.000000e+00> : vector<16x8xf32>
    %6 = tpu.matmul %5, %0, %cst {dimension_numbers = #tpu.dot_dimension_numbers<[1], [0], [0], [1], [0, 0, 1, 1], [], []>} : vector<16x16xf32>, vector<16x8xf32>, vector<16x8xf32> -> vector<16x8xf32>
    %c0_6 = arith.constant 0 : index
    %c0_7 = arith.constant 0 : index
    %c0_8 = arith.constant 0 : index
    %7 = vector.load %arg3[%c0_6, %c0_7, %c0_8] : memref<2x8x64xf32, #tpu.memory_space<vmem>>, vector<1x8x64xf32>
    %8 = vector.shape_cast %7 : vector<1x8x64xf32> to vector<8x64xf32>
    %cst_9 = arith.constant dense<0.000000e+00> : vector<16x64xf32>
    %9 = tpu.matmul %6, %8, %cst_9 {dimension_numbers = #tpu.dot_dimension_numbers<[1], [0], [0], [1], [0, 0, 1, 1], [], []>} : vector<16x8xf32>, vector<8x64xf32>, vector<16x64xf32> -> vector<16x64xf32>
    %10 = arith.addf %3, %9 : vector<16x64xf32>
    %c1 = arith.constant 1 : index
    %c0_10 = arith.constant 0 : index
    %c0_11 = arith.constant 0 : index
    %11 = vector.load %arg1[%c1, %c0_10, %c0_11] : memref<2x16x16xf32, #tpu.memory_space<vmem>>, vector<1x16x16xf32>
    %12 = vector.shape_cast %11 : vector<1x16x16xf32> to vector<16x16xf32>
    %cst_12 = arith.constant dense<0.000000e+00> : vector<16x8xf32>
    %13 = tpu.matmul %12, %0, %cst_12 {dimension_numbers = #tpu.dot_dimension_numbers<[1], [0], [0], [1], [0, 0, 1, 1], [], []>} : vector<16x16xf32>, vector<16x8xf32>, vector<16x8xf32> -> vector<16x8xf32>
    %c1_13 = arith.constant 1 : index
    %c0_14 = arith.constant 0 : index
    %c0_15 = arith.constant 0 : index
    %14 = vector.load %arg3[%c1_13, %c0_14, %c0_15] : memref<2x8x64xf32, #tpu.memory_space<vmem>>, vector<1x8x64xf32>
    %15 = vector.shape_cast %14 : vector<1x8x64xf32> to vector<8x64xf32>
    %cst_16 = arith.constant dense<0.000000e+00> : vector<16x64xf32>
    %16 = tpu.matmul %13, %15, %cst_16 {dimension_numbers = #tpu.dot_dimension_numbers<[1], [0], [0], [1], [0, 0, 1, 1], [], []>} : vector<16x8xf32>, vector<8x64xf32>, vector<16x64xf32> -> vector<16x64xf32>
    %17 = arith.addf %10, %16 : vector<16x64xf32>
    %c0_17 = arith.constant 0 : index
    %c0_18 = arith.constant 0 : index
    %18 = vector.load %arg5[%c0_17, %c0_18] : memref<16x64xf32, #tpu.memory_space<vmem>>, vector<16x64xf32>
    tpu.vector_store %arg5[%c0_17, %c0_18], %17 {strides = array<i32>} : memref<16x64xf32, #tpu.memory_space<vmem>>, vector<16x64xf32>,
    return
  }
  func.func @transform_0(%arg0: i32) -> (i32, i32, i32) {
    %c0_i32 = arith.constant 0 : i32
    %c0_i32_0 = arith.constant 0 : i32
    %c0_i32_1 = arith.constant 0 : i32
    return %c0_i32, %arg0, %c0_i32_0 : i32, i32, i32
  }
  func.func @transform_1(%arg0: i32) -> (i32, i32) {
    %c0_i32 = arith.constant 0 : i32
    %c0_i32_0 = arith.constant 0 : i32
    %c0_i32_1 = arith.constant 0 : i32
    return %c0_i32, %c0_i32_0 : i32, i32
  }
  func.func @transform_2(%arg0: i32) -> (i32, i32, i32) {
    %c0_i32 = arith.constant 0 : i32
    %c0_i32_0 = arith.constant 0 : i32
    %c0_i32_1 = arith.constant 0 : i32
    %c0_i32_2 = arith.constant 0 : i32
    return %c0_i32, %c0_i32_0, %c0_i32_1 : i32, i32, i32
  }
  func.func @transform_3(%arg0: i32) -> (i32, i32) {
    %c0_i32 = arith.constant 0 : i32
    %c0_i32_0 = arith.constant 0 : i32
    %c0_i32_1 = arith.constant 0 : i32
    return %c0_i32, %c0_i32_0 : i32, i32
  }
  func.func @transform_4(%arg0: i32) -> (i32, i32) {
    %c0_i32 = arith.constant 0 : i32
    %c0_i32_0 = arith.constant 0 : i32
    return %arg0, %c0_i32 : i32, i32
  }
}

</mosaic_0001>

<llo_original>
// kernel: tpu_custom_call.1
$region0: #{tpu_custom_call.1}
  #allocation0 [shape = 'u32[]', space=smem, size = 0x4, offset = 0x4, fixed_abs, tag = 'smem constant byte address 0x4 - core index']
  #allocation1 [shape = 'u32[144,128]{1,0:T(1,128)}', space=vmem, size = 0x12000, scoped, tag = 'internal scratch']
  %s0 = inlined_call_operand.hbm [shape: f32[2,16,16], index: 0, kind: input, shape index: {}]
  %s1 = inlined_call_operand.vmem [shape: f32[16,8], index: 1, kind: input, shape index: {}]
  %s2 = inlined_call_operand.vmem [shape: f32[2,8,64], index: 2, kind: input, shape index: {}]
  %s3 = inlined_call_operand.vmem [shape: f32[1,64], index: 3, kind: input, shape index: {}]
  %s4 = inlined_call_operand.hbm [shape: f32[16,64], index: 4, kind: output, shape index: {}]
  %s5 = sld [smem:[#allocation0]]
  $region30: #{tpu_custom_call.1} parent=0
    _
  %s7 = ssub.s32 1, %s5
  %s8 = scalar_select 0, %s7, %s5
  $region1: #{tpu_custom_call.1} parent=0
    #allocation2 [shape = 'u8[16384]{0}', space=vmem, size = 0x4000, scoped, tag = 'input window, operand 0, single buffered']
    #allocation3 [shape = 's32[1]{0}', space=sflag, size = 0x4, scoped, tag = 'scoped memory for tpu_custom_call.1']
    #allocation4 [shape = 's32[1]{0}', space=sflag, size = 0x4, scoped, tag = 'scoped memory for tpu_custom_call.1']
    #allocation5 [shape = 'u8[8192]{0}', space=vmem, size = 0x2000, scoped, tag = 'output window, operand 0, single buffered']
    %9 = vsyncpa [#allocation3], 0
    %10 = vsyncpa [#allocation4], 0
    // Predicated region
    $region2: #{tpu_custom_call.1} parent=1 // pred_check
      _
    $region3: #{tpu_custom_call.1} parent=1 // pred_check_branch
      %12 = sbr.rel (0) target = $region5
    $region4: #{tpu_custom_call.1} parent=1 // pred_region
      %s14 = ssub.s32 512, 512
      %15 = vsyncadd [#allocation3], %s14
      %s16 = sshll.u32 [#allocation2], 4
      %s17 = int_to_ptr.vmem [resolvable:$true] %s16
      %22 = dma.hbm_to_vmem [thread:$0]  %s0, 512, %s17, [#allocation3], 128, 128, 8
    $region5: #{tpu_custom_call.1} parent=1 // pred_fallthru
      _
    // Predicated region
    $region6: #{tpu_custom_call.1} parent=1 // pred_check
      _
    $region7: #{tpu_custom_call.1} parent=1 // pred_check_branch
      %24 = sbr.rel (0) target = $region9
    $region8: #{tpu_custom_call.1} parent=1 // pred_region
      _
    $region9: #{tpu_custom_call.1} parent=1 // pred_fallthru
      _
    // Predicated region
    $region10: #{tpu_custom_call.1} parent=1 // pred_check
      _
    $region11: #{tpu_custom_call.1} parent=1 // pred_check_branch
      %26 = sbr.rel (0) target = $region13
    $region12: #{tpu_custom_call.1} parent=1 // pred_region
      _
    $region13: #{tpu_custom_call.1} parent=1 // pred_fallthru
      _
    // Predicated region
    $region14: #{tpu_custom_call.1} parent=1 // pred_check
      _
    $region15: #{tpu_custom_call.1} parent=1 // pred_check_branch
      %28 = sbr.rel (0) target = $region17
    $region16: #{tpu_custom_call.1} parent=1 // pred_region
      _
    $region17: #{tpu_custom_call.1} parent=1 // pred_fallthru
      _
    // Predicated region
    $region18: #{tpu_custom_call.1} parent=1 // pred_check
      _
    $region19: #{tpu_custom_call.1} parent=1 // pred_check_branch
      %30 = sbr.rel (0) target = $region21
    $region20: #{tpu_custom_call.1} parent=1 // pred_region
      %31 = dma.done [#allocation3], 512
    $region21: #{tpu_custom_call.1} parent=1 // pred_fallthru
      _
    %v32 = vld [vmem:[%s1] sm:$0xff]
    %v33 = vld [vmem:[%s1 + $0x8] sm:$0xff]
    %v34 = vld [vmem:[%s3] sm:$0x1]
    %v36 = vlaneseq
    %v37 = vshrl.u32 %v36, 7
    %v38 = vsub.s32 0, %v37
    %v39 = vrot.slane %v34, %v38
    %v41 = vld [vmem:[#allocation2] sm:$0xff]
    %v42 = vld [vmem:[#allocation2 + $0x8] sm:$0xff]
    %vm43 = vcmask 130048
    %v45 = vsel %vm43, %v41, 0
    %v48 = vsel %vm43, %v42, 0
    %50 = vmatprep.subr.mxu0 0.0
    %51 = vmatpush1.msra.mxu0 %v32
    %52 = vmatprep.subr.mxu0 0.0
    %53 = vmatpush1.msra.mxu0 %v33
    %54 = vmatprep.subr.mxu0 0.0
    %55 = vmatpush1.msra.mxu0 0.0
    %56 = vmatprep.subr.mxu0 0.0
    %57 = vmatpush1.msra.mxu0 0.0
    %58 = vmatprep.subr.mxu0 0.0
    %59 = vmatpush1.msra.mxu0 0.0
    %60 = vmatprep.subr.mxu0 0.0
    %61 = vmatpush1.msra.mxu0 0.0
    %62 = vmatprep.subr.mxu0 0.0
    %63 = vmatpush1.msra.mxu0 0.0
    %64 = vmatprep.subr.mxu0 0.0
    %65 = vmatpush1.msra.mxu0 0.0
    %66 = vmatprep.subr.mxu0 0.0
    %67 = vmatpush1.msra.mxu0 0.0
    %68 = vmatprep.subr.mxu0 0.0
    %69 = vmatpush1.msra.mxu0 0.0
    %70 = vmatprep.subr.mxu0 0.0
    %71 = vmatpush1.msra.mxu0 0.0
    %72 = vmatprep.subr.mxu0 0.0
    %73 = vmatpush1.msra.mxu0 0.0
    %74 = vmatprep.subr.mxu0 0.0
    %75 = vmatpush1.msra.mxu0 0.0
    %76 = vmatprep.subr.mxu0 0.0
    %77 = vmatpush1.msra.mxu0 0.0
    %78 = vmatprep.subr.mxu0 0.0
    %79 = vmatpush1.msra.mxu0 0.0
    %80 = vmatprep.subr.mxu0 0.0
    %81 = vmatpush1.msra.mxu0 0.0
    %82 = vmatprep.subr.mxu0 0.0
    %83 = vmatpush1.msra.mxu0 0.0
    %84 = vmatprep.subr.mxu0 0.0
    %85 = vmatpush1.msra.mxu0 0.0
    %86 = vmatprep.subr.mxu0 0.0
    %87 = vmatpush1.msra.mxu0 0.0
    %88 = vmatprep.subr.mxu0 0.0
    %89 = vmatpush1.msra.mxu0 0.0
    %90 = vmatprep.subr.mxu0 0.0
    %91 = vmatpush1.msra.mxu0 0.0
    %92 = vmatprep.subr.mxu0 0.0
    %93 = vmatpush1.msra.mxu0 0.0
    %94 = vmatprep.subr.mxu0 0.0
    %95 = vmatpush1.msra.mxu0 0.0
    %96 = vmatprep.subr.mxu0 0.0
    %97 = vmatpush1.msra.mxu0 0.0
    %98 = vmatprep.subr.mxu0 0.0
    %99 = vmatpush1.msra.mxu0 0.0
    %100 = vmatprep.subr.mxu0 0.0
    %101 = vmatpush1.msra.mxu0 0.0
    %102 = vmatprep.subr.mxu0 0.0
    %103 = vmatpush1.msra.mxu0 0.0
    %104 = vmatprep.subr.mxu0 0.0
    %105 = vmatpush1.msra.mxu0 0.0
    %106 = vmatprep.subr.mxu0 0.0
    %107 = vmatpush1.msra.mxu0 0.0
    %108 = vmatprep.subr.mxu0 0.0
    %109 = vmatpush1.msra.mxu0 0.0
    %110 = vmatprep.subr.mxu0 0.0
    %111 = vmatpush1.msra.mxu0 0.0
    %112 = vmatprep.subr.mxu0 0.0
    %113 = vmatpush1.msra.mxu0 0.0
    %114 = vmatprep.mubr.f32.mxu0 0.0
    %115 = vmatmul.mubr.f32.gmra.mrb[0].mxu0 %v45
    %v116 = vpop.f32.mrb[0].mxu0
    %v117 = vadd.f32 0.0, %v116
    %v118 = vpop.f32.mrb[0].mxu0
    %119 = vmatprep.mubr.f32.mxu0 0.0
    %120 = vmatmul.mubr.f32.gmra.mrb[0].mxu0 %v48
    %v121 = vpop.f32.mrb[0].mxu0
    %v122 = vadd.f32 0.0, %v121
    %v123 = vpop.f32.mrb[0].mxu0
    %124 = vdwg.mxu0
    %v125 = vld [vmem:[%s2] sm:$0xff]
    %vm126 = vcmask 64512
    %v128 = vsel %vm126, %v117, 0
    %v131 = vsel %vm126, %v122, 0
    %133 = vmatprep.subr.mxu0 0.0
    %134 = vmatpush1.msra.mxu0 %v125
    %135 = vmatprep.subr.mxu0 0.0
    %136 = vmatpush1.msra.mxu0 0.0
    %137 = vmatprep.subr.mxu0 0.0
    %138 = vmatpush1.msra.mxu0 0.0
    %139 = vmatprep.subr.mxu0 0.0
    %140 = vmatpush1.msra.mxu0 0.0
    %141 = vmatprep.subr.mxu0 0.0
    %142 = vmatpush1.msra.mxu0 0.0
    %143 = vmatprep.subr.mxu0 0.0
    %144 = vmatpush1.msra.mxu0 0.0
    %145 = vmatprep.subr.mxu0 0.0
    %146 = vmatpush1.msra.mxu0 0.0
    %147 = vmatprep.subr.mxu0 0.0
    %148 = vmatpush1.msra.mxu0 0.0
    %149 = vmatprep.subr.mxu0 0.0
    %150 = vmatpush1.msra.mxu0 0.0
    %151 = vmatprep.subr.mxu0 0.0
    %152 = vmatpush1.msra.mxu0 0.0
    %153 = vmatprep.subr.mxu0 0.0
    %154 = vmatpush1.msra.mxu0 0.0
    %155 = vmatprep.subr.mxu0 0.0
    %156 = vmatpush1.msra.mxu0 0.0
    %157 = vmatprep.subr.mxu0 0.0
    %158 = vmatpush1.msra.mxu0 0.0
    %159 = vmatprep.subr.mxu0 0.0
    %160 = vmatpush1.msra.mxu0 0.0
    %161 = vmatprep.subr.mxu0 0.0
    %162 = vmatpush1.msra.mxu0 0.0
    %163 = vmatprep.subr.mxu0 0.0
    %164 = vmatpush1.msra.mxu0 0.0
    %165 = vmatprep.subr.mxu0 0.0
    %166 = vmatpush1.msra.mxu0 0.0
    %167 = vmatprep.subr.mxu0 0.0
    %168 = vmatpush1.msra.mxu0 0.0
    %169 = vmatprep.subr.mxu0 0.0
    %170 = vmatpush1.msra.mxu0 0.0
    %171 = vmatprep.subr.mxu0 0.0
    %172 = vmatpush1.msra.mxu0 0.0
    %173 = vmatprep.subr.mxu0 0.0
    %174 = vmatpush1.msra.mxu0 0.0
    %175 = vmatprep.subr.mxu0 0.0
    %176 = vmatpush1.msra.mxu0 0.0
    %177 = vmatprep.subr.mxu0 0.0
    %178 = vmatpush1.msra.mxu0 0.0
    %179 = vmatprep.subr.mxu0 0.0
    %180 = vmatpush1.msra.mxu0 0.0
    %181 = vmatprep.subr.mxu0 0.0
    %182 = vmatpush1.msra.mxu0 0.0
    %183 = vmatprep.subr.mxu0 0.0
    %184 = vmatpush1.msra.mxu0 0.0
    %185 = vmatprep.subr.mxu0 0.0
    %186 = vmatpush1.msra.mxu0 0.0
    %187 = vmatprep.subr.mxu0 0.0
    %188 = vmatpush1.msra.mxu0 0.0
    %189 = vmatprep.subr.mxu0 0.0
    %190 = vmatpush1.msra.mxu0 0.0
    %191 = vmatprep.subr.mxu0 0.0
    %192 = vmatpush1.msra.mxu0 0.0
    %193 = vmatprep.subr.mxu0 0.0
    %194 = vmatpush1.msra.mxu0 0.0
    %195 = vmatprep.subr.mxu0 0.0
    %196 = vmatpush1.msra.mxu0 0.0
    %197 = vmatprep.mubr.f32.mxu0 0.0
    %198 = vmatmul.mubr.f32.gmra.mrb[0].mxu0 %v128
    %v199 = vpop.f32.mrb[0].mxu0
    %v200 = vadd.f32 0.0, %v199
    %v201 = vpop.f32.mrb[0].mxu0
    %202 = vmatprep.mubr.f32.mxu0 0.0
    %203 = vmatmul.mubr.f32.gmra.mrb[0].mxu0 %v131
    %v204 = vpop.f32.mrb[0].mxu0
    %v205 = vadd.f32 0.0, %v204
    %v206 = vpop.f32.mrb[0].mxu0
    %207 = vdwg.mxu0
    %v208 = vadd.f32 %v39, %v200
    %v209 = vadd.f32 %v39, %v205
    %s210 = scalar_lea.vmem [#allocation2], 16
    %v211 = vld [vmem:[%s210] sm:$0xff]
    %v212 = vld [vmem:[%s210 + $0x8] sm:$0xff]
    %v214 = vsel %vm43, %v211, 0
    %v217 = vsel %vm43, %v212, 0
    %219 = vmatprep.subr.mxu0 0.0
    %220 = vmatpush1.msra.mxu0 %v32
    %221 = vmatprep.subr.mxu0 0.0
    %222 = vmatpush1.msra.mxu0 %v33
    %223 = vmatprep.subr.mxu0 0.0
    %224 = vmatpush1.msra.mxu0 0.0
    %225 = vmatprep.subr.mxu0 0.0
    %226 = vmatpush1.msra.mxu0 0.0
    %227 = vmatprep.subr.mxu0 0.0
    %228 = vmatpush1.msra.mxu0 0.0
    %229 = vmatprep.subr.mxu0 0.0
    %230 = vmatpush1.msra.mxu0 0.0
    %231 = vmatprep.subr.mxu0 0.0
    %232 = vmatpush1.msra.mxu0 0.0
    %233 = vmatprep.subr.mxu0 0.0
    %234 = vmatpush1.msra.mxu0 0.0
    %235 = vmatprep.subr.mxu0 0.0
    %236 = vmatpush1.msra.mxu0 0.0
    %237 = vmatprep.subr.mxu0 0.0
    %238 = vmatpush1.msra.mxu0 0.0
    %239 = vmatprep.subr.mxu0 0.0
    %240 = vmatpush1.msra.mxu0 0.0
    %241 = vmatprep.subr.mxu0 0.0
    %242 = vmatpush1.msra.mxu0 0.0
    %243 = vmatprep.subr.mxu0 0.0
    %244 = vmatpush1.msra.mxu0 0.0
    %245 = vmatprep.subr.mxu0 0.0
    %246 = vmatpush1.msra.mxu0 0.0
    %247 = vmatprep.subr.mxu0 0.0
    %248 = vmatpush1.msra.mxu0 0.0
    %249 = vmatprep.subr.mxu0 0.0
    %250 = vmatpush1.msra.mxu0 0.0
    %251 = vmatprep.subr.mxu0 0.0
    %252 = vmatpush1.msra.mxu0 0.0
    %253 = vmatprep.subr.mxu0 0.0
    %254 = vmatpush1.msra.mxu0 0.0
    %255 = vmatprep.subr.mxu0 0.0
    %256 = vmatpush1.msra.mxu0 0.0
    %257 = vmatprep.subr.mxu0 0.0
    %258 = vmatpush1.msra.mxu0 0.0
    %259 = vmatprep.subr.mxu0 0.0
    %260 = vmatpush1.msra.mxu0 0.0
    %261 = vmatprep.subr.mxu0 0.0
    %262 = vmatpush1.msra.mxu0 0.0
    %263 = vmatprep.subr.mxu0 0.0
    %264 = vmatpush1.msra.mxu0 0.0
    %265 = vmatprep.subr.mxu0 0.0
    %266 = vmatpush1.msra.mxu0 0.0
    %267 = vmatprep.subr.mxu0 0.0
    %268 = vmatpush1.msra.mxu0 0.0
    %269 = vmatprep.subr.mxu0 0.0
    %270 = vmatpush1.msra.mxu0 0.0
    %271 = vmatprep.subr.mxu0 0.0
    %272 = vmatpush1.msra.mxu0 0.0
    %273 = vmatprep.subr.mxu0 0.0
    %274 = vmatpush1.msra.mxu0 0.0
    %275 = vmatprep.subr.mxu0 0.0
    %276 = vmatpush1.msra.mxu0 0.0
    %277 = vmatprep.subr.mxu0 0.0
    %278 = vmatpush1.msra.mxu0 0.0
    %279 = vmatprep.subr.mxu0 0.0
    %280 = vmatpush1.msra.mxu0 0.0
    %281 = vmatprep.subr.mxu0 0.0
    %282 = vmatpush1.msra.mxu0 0.0
    %283 = vmatprep.mubr.f32.mxu0 0.0
    %284 = vmatmul.mubr.f32.gmra.mrb[0].mxu0 %v214
    %v285 = vpop.f32.mrb[0].mxu0
    %v286 = vadd.f32 0.0, %v285
    %v287 = vpop.f32.mrb[0].mxu0
    %288 = vmatprep.mubr.f32.mxu0 0.0
    %289 = vmatmul.mubr.f32.gmra.mrb[0].mxu0 %v217
    %v290 = vpop.f32.mrb[0].mxu0
    %v291 = vadd.f32 0.0, %v290
    %v292 = vpop.f32.mrb[0].mxu0
    %293 = vdwg.mxu0
    %s294 = scalar_lea.vmem %s2, 8
    %v295 = vld [vmem:[%s294] sm:$0xff]
    %v297 = vsel %vm126, %v286, 0
    %v300 = vsel %vm126, %v291, 0
    %302 = vmatprep.subr.mxu0 0.0
    %303 = vmatpush1.msra.mxu0 %v295
    %304 = vmatprep.subr.mxu0 0.0
    %305 = vmatpush1.msra.mxu0 0.0
    %306 = vmatprep.subr.mxu0 0.0
    %307 = vmatpush1.msra.mxu0 0.0
    %308 = vmatprep.subr.mxu0 0.0
    %309 = vmatpush1.msra.mxu0 0.0
    %310 = vmatprep.subr.mxu0 0.0
    %311 = vmatpush1.msra.mxu0 0.0
    %312 = vmatprep.subr.mxu0 0.0
    %313 = vmatpush1.msra.mxu0 0.0
    %314 = vmatprep.subr.mxu0 0.0
    %315 = vmatpush1.msra.mxu0 0.0
    %316 = vmatprep.subr.mxu0 0.0
    %317 = vmatpush1.msra.mxu0 0.0
    %318 = vmatprep.subr.mxu0 0.0
    %319 = vmatpush1.msra.mxu0 0.0
    %320 = vmatprep.subr.mxu0 0.0
    %321 = vmatpush1.msra.mxu0 0.0
    %322 = vmatprep.subr.mxu0 0.0
    %323 = vmatpush1.msra.mxu0 0.0
    %324 = vmatprep.subr.mxu0 0.0
    %325 = vmatpush1.msra.mxu0 0.0
    %326 = vmatprep.subr.mxu0 0.0
    %327 = vmatpush1.msra.mxu0 0.0
    %328 = vmatprep.subr.mxu0 0.0
    %329 = vmatpush1.msra.mxu0 0.0
    %330 = vmatprep.subr.mxu0 0.0
    %331 = vmatpush1.msra.mxu0 0.0
    %332 = vmatprep.subr.mxu0 0.0
    %333 = vmatpush1.msra.mxu0 0.0
    %334 = vmatprep.subr.mxu0 0.0
    %335 = vmatpush1.msra.mxu0 0.0
    %336 = vmatprep.subr.mxu0 0.0
    %337 = vmatpush1.msra.mxu0 0.0
    %338 = vmatprep.subr.mxu0 0.0
    %339 = vmatpush1.msra.mxu0 0.0
    %340 = vmatprep.subr.mxu0 0.0
    %341 = vmatpush1.msra.mxu0 0.0
    %342 = vmatprep.subr.mxu0 0.0
    %343 = vmatpush1.msra.mxu0 0.0
    %344 = vmatprep.subr.mxu0 0.0
    %345 = vmatpush1.msra.mxu0 0.0
    %346 = vmatprep.subr.mxu0 0.0
    %347 = vmatpush1.msra.mxu0 0.0
    %348 = vmatprep.subr.mxu0 0.0
    %349 = vmatpush1.msra.mxu0 0.0
    %350 = vmatprep.subr.mxu0 0.0
    %351 = vmatpush1.msra.mxu0 0.0
    %352 = vmatprep.subr.mxu0 0.0
    %353 = vmatpush1.msra.mxu0 0.0
    %354 = vmatprep.subr.mxu0 0.0
    %355 = vmatpush1.msra.mxu0 0.0
    %356 = vmatprep.subr.mxu0 0.0
    %357 = vmatpush1.msra.mxu0 0.0
    %358 = vmatprep.subr.mxu0 0.0
    %359 = vmatpush1.msra.mxu0 0.0
    %360 = vmatprep.subr.mxu0 0.0
    %361 = vmatpush1.msra.mxu0 0.0
    %362 = vmatprep.subr.mxu0 0.0
    %363 = vmatpush1.msra.mxu0 0.0
    %364 = vmatprep.subr.mxu0 0.0
    %365 = vmatpush1.msra.mxu0 0.0
    %366 = vmatprep.mubr.f32.mxu0 0.0
    %367 = vmatmul.mubr.f32.gmra.mrb[0].mxu0 %v297
    %v368 = vpop.f32.mrb[0].mxu0
    %v369 = vadd.f32 0.0, %v368
    %v370 = vpop.f32.mrb[0].mxu0
    %371 = vmatprep.mubr.f32.mxu0 0.0
    %372 = vmatmul.mubr.f32.gmra.mrb[0].mxu0 %v300
    %v373 = vpop.f32.mrb[0].mxu0
    %v374 = vadd.f32 0.0, %v373
    %v375 = vpop.f32.mrb[0].mxu0
    %376 = vdwg.mxu0
    %v377 = vadd.f32 %v208, %v369
    %v378 = vadd.f32 %v209, %v374
    %vm379 = vcmask 523264
    %380 = vst.msk [vmem:[#allocation5] sm:$0xff] %vm379, %v377
    %381 = vst.msk [vmem:[#allocation5 + $0x8] sm:$0xff] %vm379, %v378
    // Predicated region
    $region22: #{tpu_custom_call.1} parent=1 // pred_check
      _
    $region23: #{tpu_custom_call.1} parent=1 // pred_check_branch
      %383 = sbr.rel (0) target = $region25
    $region24: #{tpu_custom_call.1} parent=1 // pred_region
      %s385 = ssub.s32 256, 256
      %386 = vsyncadd [#allocation4], %s385
      %s387 = sshll.u32 [#allocation5], 4
      %s388 = int_to_ptr.vmem [resolvable:$true] %s387
      %393 = dma.vmem_to_hbm [thread:$0]  %s388, 256, %s4, [#allocation4], 128, 128, 8
    $region25: #{tpu_custom_call.1} parent=1 // pred_fallthru
      _
    // Predicated region
    $region26: #{tpu_custom_call.1} parent=1 // pred_check
      _
    $region27: #{tpu_custom_call.1} parent=1 // pred_check_branch
      %395 = sbr.rel (0) target = $region29
    $region28: #{tpu_custom_call.1} parent=1 // pred_region
      %396 = dma.done [#allocation4], 256
    $region29: #{tpu_custom_call.1} parent=1 // pred_fallthru
      _
    %397 = vsyncpa [#allocation3], 1
    %398 = vsyncpa [#allocation4], 1

</llo_original>
